<compile_context>
chip_gen: v7x
topology: tpu7x:2x2x1
jax: 0.10.0
libtpu: 0.0.40
codegen_flags: <defaults>
</compile_context>

<pallas_src>
import jax
import jax.numpy as jnp
from jax import lax
from jax.experimental import pallas as pl
from jax.experimental.pallas import tpu as pltpu

_LANE = 128
_TARGET_BLOCK_BYTES = 6 * 1024 * 1024   # per-step input block (DMA granularity)
_VMEM_BUDGET_BYTES = 20 * 1024 * 1024   # planned live VMEM (dbl-buffers + accumulators)
_VMEM_LIMIT_BYTES = 32 * 1024 * 1024    # explicit scoped-VMEM limit (safe on v5e/v6e/v7x)


def _chunk_for(dtype) -> int:
    """Sublane-aligned channel chunk: 8 rows of 32-bit, 16 of 16-bit, 32 of 8-bit."""
    itemsize = jnp.dtype(dtype).itemsize
    return max(8, 8 * (4 // max(1, itemsize)))


def _maxavg_kernel(x_ref, o_ref):
    # x_ref block: (TN, C, T_hw)   o_ref block: (TN, 2, T_hw)
    tn, c, t_hw = x_ref.shape
    chunk = _chunk_for(x_ref.dtype)
    n_full = c // chunk
    rem = c - n_full * chunk
    f32 = jnp.float32

    if n_full >= 1:
        # Dense, sublane-resident accumulators: the loop body is pure
        # elementwise add/max (no per-chunk cross-sublane reduce in the hot loop).
        first = x_ref[:, pl.ds(0, chunk), :]
        sum_acc = first.astype(f32)
        max_acc = first                                  # max stays in native dtype
        if n_full > 1:
            def body(i, carry):
                s_acc, m_acc = carry
                start = pl.multiple_of(i * chunk, chunk)
                xc = x_ref[:, pl.ds(start, chunk), :]
                return s_acc + xc.astype(f32), jnp.maximum(m_acc, xc)

            trips = n_full - 1
            sum_acc, max_acc = lax.fori_loop(
                1, n_full, body, (sum_acc, max_acc),
                unroll=True if trips <= 8 else 8)

        # Single cross-sublane (XLU) reduce per block.
        s = jnp.sum(sum_acc, axis=1, keepdims=True)      # (TN,1,T_hw) f32
        m = jnp.max(max_acc, axis=1, keepdims=True)      # (TN,1,T_hw) native
        if rem > 0:                                      # static tail chunk
            tail = x_ref[:, pl.ds(n_full * chunk, rem), :]
            s = s + jnp.sum(tail.astype(f32), axis=1, keepdims=True)
            m = jnp.maximum(m, jnp.max(tail, axis=1, keepdims=True))
    else:
        # C smaller than one sublane chunk: reduce the whole block directly.
        tail = x_ref[:, pl.ds(0, c), :]
        s = jnp.sum(tail.astype(f32), axis=1, keepdims=True)
        m = jnp.max(tail, axis=1, keepdims=True)

    # Mean via a precomputed f32 reciprocal (~1 ULP vs true division).
    mean = (s * f32(1.0 / c)).astype(o_ref.dtype)
    o_ref[:, 0:1, :] = mean
    o_ref[:, 1:2, :] = m.astype(o_ref.dtype)


def max_avg(x):
    """x: (N, C, H, W) -> (N, 2, H, W). Mirrors MaxAvg.forward."""
    N, C, H, W = x.shape
    HW = H * W
    itemsize = jnp.dtype(x.dtype).itemsize
    chunk = _chunk_for(x.dtype)

    # Estimated live VMEM per spatial column (per sample): double-buffered
    # input rows + dense accumulators (+ one f32 cast temp) + double-buffered
    # 8-sublane-padded output rows + slack for small temporaries.
    acc_rows = min(C, chunk)
    col_cost = (2 * C * itemsize
                + acc_rows * (4 + itemsize)
                + acc_rows * 4
                + 2 * 8 * itemsize
                + 32)

    # Lane-dense spatial tile (multiple of 128, or the full HW when tiny).
    if HW <= _LANE:
        t_hw = HW
    else:
        by_budget = (_VMEM_BUDGET_BYTES // col_cost) // _LANE * _LANE
        by_block = (_TARGET_BLOCK_BYTES // max(1, C * itemsize)) // _LANE * _LANE
        t_hw = max(_LANE, min(by_budget, by_block))
        t_hw = min(t_hw, pl.cdiv(HW, _LANE) * _LANE)

    # Batch several samples per block when one sample's block is small, so each
    # grid step moves a meaningful amount of data (~0.35us/step overhead).
    tn = 1
    if N > 1:
        per_sample = col_cost * t_hw
        tn = int(min(N,
                     max(1, _VMEM_BUDGET_BYTES // per_sample),
                     max(1, _TARGET_BLOCK_BYTES // max(1, C * itemsize * t_hw))))

    grid_n = pl.cdiv(N, tn)        # ragged last batch block: OOB writes dropped
    hw_tiles = pl.cdiv(HW, t_hw)   # ragged last spatial block: OOB writes dropped

    # Make sure both v7x TensorCores get work (>= 2 parallel grid steps).
    if grid_n * hw_tiles < 2:
        if HW > _LANE:
            t_hw = max(_LANE, pl.cdiv(pl.cdiv(HW, 2), _LANE) * _LANE)
            hw_tiles = pl.cdiv(HW, t_hw)
        elif N > 1:
            tn = pl.cdiv(N, 2)
            grid_n = pl.cdiv(N, tn)

    xf = x.reshape(N, C, HW)       # free reshape on contiguous NCHW; no padding

    out = pl.pallas_call(
        _maxavg_kernel,
        out_shape=jax.ShapeDtypeStruct((N, 2, HW), x.dtype),
        grid_spec=pltpu.PrefetchScalarGridSpec(
            num_scalar_prefetch=0,
            grid=(grid_n, hw_tiles),
            in_specs=[pl.BlockSpec((tn, C, t_hw), lambda n, t: (n, 0, t))],
            out_specs=pl.BlockSpec((tn, 2, t_hw), lambda n, t: (n, 0, t)),
        ),
        compiler_params=pltpu.CompilerParams(
            dimension_semantics=("parallel", "parallel"),
            vmem_limit_bytes=_VMEM_LIMIT_BYTES,
        ),
    )(xf)

    return out.reshape(N, 2, H, W)


if __name__ == "__main__":
    key = jax.random.PRNGKey(0)
    x = jax.random.normal(key, (2, 4, 16, 16), dtype=jnp.float32)

    out = jax.block_until_ready(max_avg(x))

    # Reference (matches torch.mean / torch.max over dim=1 + cat).
    ref = jnp.concatenate(
        [jnp.mean(x, axis=1, keepdims=True), jnp.max(x, axis=1, keepdims=True)],
        axis=1,
    )
    assert out.shape == (2, 2, 16, 16), out.shape
    assert jnp.allclose(out, ref, atol=1e-6, rtol=1e-6)

    print("KERNEL_OK")
</pallas_src>

<mosaic_0001>
module attributes {stable_mosaic.version = 11 : i64} {
  func.func @_maxavg_kernel(%arg0: i32, %arg1: i32, %arg2: memref<2x4x128xf32, #tpu.memory_space<vmem>>, %arg3: memref<2x2x128xf32, #tpu.memory_space<vmem>>) attributes {dimension_semantics = [#tpu.dimension_semantics<parallel>, #tpu.dimension_semantics<parallel>], iteration_bounds = array<i64: 1, 2>, scalar_prefetch = 0 : i64, scratch_operands = 0 : i64, tpu.core_type = #tpu.core_type<tc>, window_params = [{transform_indices = @transform_0, window_bounds = array<i64: 2, 4, 128>}, {transform_indices = @transform_1, window_bounds = array<i64: 2, 2, 128>}]} {
    %c0 = arith.constant 0 : index
    %c0_0 = arith.constant 0 : index
    %c0_1 = arith.constant 0 : index
    %0 = vector.load %arg2[%c0, %c0_0, %c0_1] : memref<2x4x128xf32, #tpu.memory_space<vmem>>, vector<2x4x128xf32>
    %cst = arith.constant dense<0.000000e+00> : vector<2x128xf32>
    %1 = vector.multi_reduction <add>, %0, %cst [1] : vector<2x4x128xf32> to vector<2x128xf32>
    %2 = vector.shape_cast %1 : vector<2x128xf32> to vector<2x1x128xf32>
    %cst_2 = arith.constant dense<0xFF800000> : vector<2x128xf32>
    %3 = vector.multi_reduction <maximumf>, %0, %cst_2 [1] : vector<2x4x128xf32> to vector<2x128xf32>
    %4 = vector.shape_cast %3 : vector<2x128xf32> to vector<2x1x128xf32>
    %cst_3 = arith.constant 2.500000e-01 : f32
    %5 = vector.broadcast %cst_3 : f32 to vector<2x1x128xf32>
    %6 = arith.mulf %2, %5 : vector<2x1x128xf32>
    %c0_4 = arith.constant 0 : index
    %c0_5 = arith.constant 0 : index
    %c0_6 = arith.constant 0 : index
    %7 = vector.load %arg3[%c0_4, %c0_5, %c0_6] : memref<2x2x128xf32, #tpu.memory_space<vmem>>, vector<2x1x128xf32>
    tpu.vector_store %arg3[%c0_4, %c0_5, %c0_6], %6 {strides = array<i32>} : memref<2x2x128xf32, #tpu.memory_space<vmem>>, vector<2x1x128xf32>,
    %c0_7 = arith.constant 0 : index
    %c1 = arith.constant 1 : index
    %c0_8 = arith.constant 0 : index
    %8 = vector.load %arg3[%c0_7, %c1, %c0_8] : memref<2x2x128xf32, #tpu.memory_space<vmem>>, vector<2x1x128xf32>
    tpu.vector_store %arg3[%c0_7, %c1, %c0_8], %4 {strides = array<i32>} : memref<2x2x128xf32, #tpu.memory_space<vmem>>, vector<2x1x128xf32>,
    return
  }
  func.func @transform_0(%arg0: i32, %arg1: i32) -> (i32, i32, i32) {
    %c0_i32 = arith.constant 0 : i32
    %c0_i32_0 = arith.constant 0 : i32
    return %arg0, %c0_i32, %arg1 : i32, i32, i32
  }
  func.func @transform_1(%arg0: i32, %arg1: i32) -> (i32, i32, i32) {
    %c0_i32 = arith.constant 0 : i32
    %c0_i32_0 = arith.constant 0 : i32
    return %arg0, %c0_i32, %arg1 : i32, i32, i32
  }
}

</mosaic_0001>

<llo_original>
// kernel: tpu_custom_call.1
$region0: #{tpu_custom_call.1}
  #allocation0 [shape = 'u32[]', space=smem, size = 0x4, offset = 0x4, fixed_abs, tag = 'smem constant byte address 0x4 - core index']
  #allocation1 [shape = 'u32[144,128]{1,0:T(1,128)}', space=vmem, size = 0x12000, scoped, tag = 'internal scratch']
  %s0 = inlined_call_operand.hbm [shape: f32[2,4,256], index: 0, kind: input, shape index: {}]
  %s1 = inlined_call_operand.hbm [shape: f32[2,2,256], index: 1, kind: output, shape index: {}]
  %s2 = sld [smem:[#allocation0]]
  $region41: #{tpu_custom_call.1} parent=0
    _
  %s4 = ssub.s32 1, %s2
  %s5 = scalar_select 0, %s4, %s2
  $region1: #{tpu_custom_call.1} parent=0
    #allocation2 [shape = 'u8[8192]{0}', space=vmem, size = 0x2000, scoped, tag = 'input window, operand 0']
    #allocation3 [shape = 's32[2]{0}', space=sflag, size = 0x8, scoped, tag = 'scoped memory for tpu_custom_call.1']
    #allocation4 [shape = 's32[2]{0}', space=sflag, size = 0x8, scoped, tag = 'scoped memory for tpu_custom_call.1']
    #allocation5 [shape = 'u8[4096]{0}', space=vmem, size = 0x1000, scoped, tag = 'output window, operand 0']
    %6 = vsyncpa [#allocation3], 0
    %s7 = scalar_lea.sflag [#allocation3], 1
    %8 = vsyncpa %s7, 0
    %9 = vsyncpa [#allocation4], 0
    %s10 = scalar_lea.sflag [#allocation4], 1
    %11 = vsyncpa %s10, 0
    loop: start=0, step=1, limit=4
    $region2: #{tpu_custom_call.1} parent=1 // loop_pre_header
      _
    $region3: #{tpu_custom_call.1} parent=1 // loop_header
      %s13 = sphi 0, %s17
      %p14 = scmp.ge.s32.totalorder %s13, 4
      %s20 = sphi 0, %s32
      %s21 = sphi 0, %s28
      %s22 = sphi 0, %s20
      %s23 = sphi 0, %s21
      %s24 = sphi 0, %s22
      %s25 = sphi 0, %s23
      %s37 = sphi 0, %s39
      %s40 = sphi 0, %s37
      %s41 = sphi 0, %s40
      %s57 = sphi 0, %s41
      %s65 = sphi 0, %s67
      %s68 = sphi 0, %s65
      %s69 = sphi 0, %s68
      %s85 = sphi 0, %s69
    $region4: #{tpu_custom_call.1} parent=1 // loop_header_branch
      %16 = sbr.rel (%p14) target = $region8
    $region5: #{tpu_custom_call.1} parent=1 // loop_body
      %s18 = ssub.s32 %s13, 1
      %s19 = ssub.s32 %s13, 2
      %s26 = sadd.s32 1, %s21
      %p27 = scmp.ge.s32.totalorder %s26, 2
      %s28 = scalar_select %p27, 0, %s26
      %s29 = sadd.s32 1, %s20
      %s30 = scalar_select %p27, %s29, %s20
      %p31 = scmp.ge.s32.totalorder %s30, 1
      %s32 = scalar_select %p31, 0, %s30
      %s33 = ssub.s32 %s20, %s32
      %s34 = ssub.s32 %s21, %s28
      %s35 = sor.u32 %s33, %s34
      %p36 = scmp.eq.s32.totalorder %s35, 0
      %s38 = sadd.s32 %s37, 1
      %s39 = scalar_select %p36, %s37, %s38
      %p42 = pneg %p36
      %p43 = scmp.eq.s32.totalorder %s13, 1
      %p44 = por %p42, %p43
      %p45 = scmp.ne.s32.totalorder %s37, %s40
      %p46 = scmp.eq.s32.totalorder %s13, 0
      %p47 = por %p45, %p46
      %p48 = scmp.ne.s32.totalorder %s37, %s40
      %p49 = scmp.eq.s32.totalorder %s18, 1
      %p50 = por %p48, %p49
      %p51 = scmp.ne.s32.totalorder %s40, %s41
      %p52 = scmp.eq.s32.totalorder %s18, 0
      %p53 = por %p51, %p52
      %p54 = scmp.ne.s32.totalorder %s40, %s41
      %p55 = scmp.eq.s32.totalorder %s19, 1
      %p56 = por %p54, %p55
      %p58 = scmp.ne.s32.totalorder %s41, %s57
      %p59 = scmp.eq.s32.totalorder %s19, 0
      %p60 = por %p58, %p59
      %s61 = ssub.s32 %s20, %s32
      %s62 = ssub.s32 %s21, %s28
      %s63 = sor.u32 %s61, %s62
      %p64 = scmp.eq.s32.totalorder %s63, 0
      %s66 = sadd.s32 %s65, 1
      %s67 = scalar_select %p64, %s65, %s66
      %p70 = pneg %p64
      %p71 = scmp.eq.s32.totalorder %s13, 1
      %p72 = por %p70, %p71
      %p73 = scmp.ne.s32.totalorder %s65, %s68
      %p74 = scmp.eq.s32.totalorder %s13, 0
      %p75 = por %p73, %p74
      %p76 = scmp.ne.s32.totalorder %s65, %s68
      %p77 = scmp.eq.s32.totalorder %s18, 1
      %p78 = por %p76, %p77
      %p79 = scmp.ne.s32.totalorder %s68, %s69
      %p80 = scmp.eq.s32.totalorder %s18, 0
      %p81 = por %p79, %p80
      %p82 = scmp.ne.s32.totalorder %s68, %s69
      %p83 = scmp.eq.s32.totalorder %s19, 1
      %p84 = por %p82, %p83
      %p86 = scmp.ne.s32.totalorder %s69, %s85
      %p87 = scmp.eq.s32.totalorder %s19, 0
      %p88 = por %p86, %p87
      %p89 = scmp.le.s32.totalorder 1, %s13
      %p90 = scmp.lt.s32.totalorder %s13, 3
      %p91 = pnand %p89, %p90
      %p92 = pneg %p91
      // Predicated region
      $region9: #{tpu_custom_call.1} parent=5 // pred_check
        _
      $region10: #{tpu_custom_call.1} parent=5 // pred_check_branch
        %94 = sbr.rel (%p91) target = $region12
      $region11: #{tpu_custom_call.1} parent=5 // pred_region
        %s95 = ssub.s32 %s13, 1
      $region12: #{tpu_custom_call.1} parent=5 // pred_fallthru
        _
      %p96 = scmp.lt.s32.totalorder %s13, 2
      // Predicated region
      $region13: #{tpu_custom_call.1} parent=5 // pred_check
        %p97 = pneg %p96
      $region14: #{tpu_custom_call.1} parent=5 // pred_check_branch
        %99 = sbr.rel (%p97) target = $region16
      $region15: #{tpu_custom_call.1} parent=5 // pred_region
        // Predicated region
        $region17: #{tpu_custom_call.1} parent=15 // pred_check
          %p100 = pneg %p47
        $region18: #{tpu_custom_call.1} parent=15 // pred_check_branch
          %102 = sbr.rel (%p100) target = $region20
        $region19: #{tpu_custom_call.1} parent=15 // pred_region
          %s103 = sand.u32 %s37, 1
          %s104 = scalar_lea.sflag [#allocation3], %s103
          %s105 = sand.u32 %s37, 1
          %s106 = smul.addr %s105, 8
          %s107 = scalar_lea.vmem [#allocation2], %s106
          %s108 = smul.u32 2, %s20
          %s110 = ssub.s32 128, 128
          %111 = vsyncadd %s104, %s110
          %s112 = smul.addr %s108, 2
          %s113 = sadd.s32 %s21, %s112
          %s114 = smul.addr %s113, 64
          %s115 = scalar_lea.hbm %s0, %s114
          %s116 = sshll.u32 %s107, 4
          %s117 = int_to_ptr.vmem [resolvable:$true] %s116
          %122 = dma.hbm_to_vmem [thread:$0]  %s115, 128, %s117, %s104, 128, 64, 4
        $region20: #{tpu_custom_call.1} parent=15 // pred_fallthru
          _
      $region16: #{tpu_custom_call.1} parent=5 // pred_fallthru
        _
      %p123 = scmp.le.s32.totalorder 1, %s13
      %p124 = scmp.lt.s32.totalorder %s13, 3
      %p125 = pnand %p123, %p124
      %p126 = pneg %p125
      // Predicated region
      $region21: #{tpu_custom_call.1} parent=5 // pred_check
        _
      $region22: #{tpu_custom_call.1} parent=5 // pred_check_branch
        %128 = sbr.rel (%p125) target = $region24
      $region23: #{tpu_custom_call.1} parent=5 // pred_region
        %s129 = ssub.s32 %s13, 1
        %s130 = sand.u32 %s40, 1
        %s131 = scalar_lea.sflag [#allocation3], %s130
        %s132 = sand.u32 %s40, 1
        %s133 = smul.addr %s132, 8
        %s134 = scalar_lea.vmem [#allocation2], %s133
        // Predicated region
        $region25: #{tpu_custom_call.1} parent=23 // pred_check
          %p135 = pneg %p53
        $region26: #{tpu_custom_call.1} parent=23 // pred_check_branch
          %137 = sbr.rel (%p135) target = $region28
        $region27: #{tpu_custom_call.1} parent=23 // pred_region
          %138 = dma.done %s131, 128
        $region28: #{tpu_custom_call.1} parent=23 // pred_fallthru
          _
        %s139 = sand.u32 %s40, 1
        %s140 = scalar_lea.sflag [#allocation3], %s139
        %s141 = sand.u32 %s40, 1
        %s142 = smul.addr %s141, 8
        %s143 = scalar_lea.vmem [#allocation2], %s142
        %p144 = pneg %p53
        %p145 = pneg %p50
        %p146 = pneg %p81
        %p147 = pneg %p78
        %s148 = sand.u32 %s68, 1
        %s149 = scalar_lea.sflag [#allocation4], %s148
        %s150 = sand.u32 %s68, 1
        %s151 = smul.addr %s150, 4
        %s152 = scalar_lea.vmem [#allocation5], %s151
        %s153 = smul.u32 2, %s22
        %s154 = smul.u32 2, %s22
        %v155 = vld [vmem:[%s134] sm:$0xf]
        %v156 = vld [vmem:[%s134 + $0x4] sm:$0xf]
        %vm157 = vcmask 1043456
        %v158 = vsel %vm157, %v155, 0.0
        %v159 = vrot.slane %v158, 4
        %v160 = vadd.f32 %v158, %v159
        %v161 = vrot.slane %v160, 2
        %v162 = vadd.f32 %v160, %v161
        %v163 = vrot.slane %v162, 1
        %v164 = vadd.f32 %v162, %v163
        %v165 = vsel %vm157, %v156, 0.0
        %v166 = vrot.slane %v165, 4
        %v167 = vadd.f32 %v165, %v166
        %v168 = vrot.slane %v167, 2
        %v169 = vadd.f32 %v167, %v168
        %v170 = vrot.slane %v169, 1
        %v171 = vadd.f32 %v169, %v170
        %v172 = vsel %vm157, %v155, -inf
        %v173 = vrot.slane %v172, 4
        %v174 = vmax.f32 %v172, %v173
        %v175 = vrot.slane %v174, 2
        %v176 = vmax.f32 %v174, %v175
        %v177 = vrot.slane %v176, 1
        %v178 = vmax.f32 %v176, %v177
        %v179 = vsel %vm157, %v156, -inf
        %v180 = vrot.slane %v179, 4
        %v181 = vmax.f32 %v179, %v180
        %v182 = vrot.slane %v181, 2
        %v183 = vmax.f32 %v181, %v182
        %v184 = vrot.slane %v183, 1
        %v185 = vmax.f32 %v183, %v184
        %v186 = vmul.f32 %v164, 0.25
        %v187 = vmul.f32 %v171, 0.25
        %188 = vst [vmem:[%s152] sm:$0x1] %v186
        %189 = vst [vmem:[%s152 + $0x2] sm:$0x1] %v187
        %190 = vst [vmem:[%s152 + $0x1] sm:$0x1] %v178
        %191 = vst [vmem:[%s152 + $0x3] sm:$0x1] %v185
        %s192 = sand.u32 %s68, 1
        %s193 = scalar_lea.sflag [#allocation4], %s192
        %s194 = sand.u32 %s68, 1
        %s195 = smul.addr %s194, 4
        %s196 = scalar_lea.vmem [#allocation5], %s195
        // Predicated region
        $region29: #{tpu_custom_call.1} parent=23 // pred_check
          %p197 = pneg %p78
        $region30: #{tpu_custom_call.1} parent=23 // pred_check_branch
          %199 = sbr.rel (%p197) target = $region32
        $region31: #{tpu_custom_call.1} parent=23 // pred_region
          %s200 = smul.u32 2, %s22
          %s202 = ssub.s32 64, 64
          %203 = vsyncadd %s193, %s202
          %s204 = smul.addr %s200, 2
          %s205 = sadd.s32 %s23, %s204
          %s206 = smul.addr %s205, 32
          %s207 = scalar_lea.hbm %s1, %s206
          %s208 = sshll.u32 %s196, 4
          %s209 = int_to_ptr.vmem [resolvable:$true] %s208
          %214 = dma.vmem_to_hbm [thread:$0]  %s209, 64, %s207, %s193, 32, 64, 2
        $region32: #{tpu_custom_call.1} parent=23 // pred_fallthru
          _
      $region24: #{tpu_custom_call.1} parent=5 // pred_fallthru
        _
      %p215 = scmp.le.s32.totalorder 2, %s13
      // Predicated region
      $region33: #{tpu_custom_call.1} parent=5 // pred_check
        %p216 = pneg %p215
      $region34: #{tpu_custom_call.1} parent=5 // pred_check_branch
        %218 = sbr.rel (%p216) target = $region36
      $region35: #{tpu_custom_call.1} parent=5 // pred_region
        %s219 = ssub.s32 %s13, 2
        // Predicated region
        $region37: #{tpu_custom_call.1} parent=35 // pred_check
          %p220 = pneg %p84
        $region38: #{tpu_custom_call.1} parent=35 // pred_check_branch
          %222 = sbr.rel (%p220) target = $region40
        $region39: #{tpu_custom_call.1} parent=35 // pred_region
          %s223 = sand.u32 %s69, 1
          %s224 = scalar_lea.sflag [#allocation4], %s223
          %s225 = sand.u32 %s69, 1
          %s226 = smul.addr %s225, 4
          %s227 = scalar_lea.vmem [#allocation5], %s226
          %228 = dma.done %s224, 64
        $region40: #{tpu_custom_call.1} parent=35 // pred_fallthru
          _
      $region36: #{tpu_custom_call.1} parent=5 // pred_fallthru
        _
    $region6: #{tpu_custom_call.1} parent=1 // loop_footer
      %s17 = sadd.s32 1, %s13
    $region7: #{tpu_custom_call.1} parent=1 // loop_footer_branch
      %12 = sbr.rel target = $region3
    $region8: #{tpu_custom_call.1} parent=1 // loop_exit
      _
    %229 = vsyncpa [#allocation3], 1
    %s230 = scalar_lea.sflag [#allocation3], 1
    %231 = vsyncpa %s230, 1
    %232 = vsyncpa [#allocation4], 1
    %s233 = scalar_lea.sflag [#allocation4], 1
    %234 = vsyncpa %s233, 1

</llo_original>
